<compile_context>
chip_gen: v5e
topology: v5e:2x2
jax: 0.10.0
libtpu: 0.0.40
codegen_flags: <defaults>
</compile_context>

<pallas_src>
import jax
import jax.numpy as jnp
from jax.experimental import pallas as pl
from jax.experimental.pallas import tpu as pltpu

INPUT_SIZE = 196
HIDDEN_SIZE = 10
NUM_CLASSES = 10

HID_PAD = 128     # 10 -> 128 : lane-dense hidden activation
OUT_PAD = 128     # 10 -> 128 : lane-dense (unmasked) output stores
MAX_TB = 2048     # batch rows per grid step (fits scoped VMEM on v5e/v6e/v7x)
TB_ALIGN = 16


def _round_up(n, m):
    return ((n + m - 1) // m) * m


def mlp_kernel(x_ref, w1_ref, b1_ref, w2_ref, b2_ref, o_ref):
    # x arrives in its HBM dtype (f32); cast to bf16 in-kernel (VPU has huge slack)
    # instead of paying a separate pad/cast HBM pass in the wrapper.
    x = x_ref[...].astype(jnp.bfloat16)
    # l1: x @ W1 + b1   (bf16 operands, f32 MXU accumulation)
    h = jnp.dot(x, w1_ref[...], preferred_element_type=jnp.float32)
    h = jnp.maximum(h + b1_ref[...], 0.0)                     # bias + ReLU in f32
    # l2: h @ W2 + b2
    out = jnp.dot(h.astype(w2_ref.dtype), w2_ref[...],
                  preferred_element_type=jnp.float32)
    o_ref[...] = (out + b2_ref[...]).astype(o_ref.dtype)


def neural_net_forward(x, w1, b1, w2, b2, *, out_dtype=jnp.float32):
    """Forward pass of NeuralNet: relu(x @ w1 + b1) @ w2 + b2.

    x : [batch, 196] float (read directly from HBM; cast to bf16 inside the kernel)
    w1: [196, 10]  b1: [10]
    w2: [10, 10]   b2: [10]
    Returns [batch, 10] in `out_dtype` (default float32, matching the PyTorch module).
    """
    batch = x.shape[0]
    assert x.shape[1] == INPUT_SIZE

    # ---- batch tiling --------------------------------------------------
    if batch <= 1024:
        tb = batch                                    # one full-extent block (always legal)
    elif batch <= 2 * MAX_TB:
        # Split into >= 2 blocks so v7x's second TensorCore gets work.
        tb = _round_up(pl.cdiv(batch, 2), TB_ALIGN)
    else:
        tb = MAX_TB
    grid_b = pl.cdiv(batch, tb)                       # partial boundary block is fine

    # ---- weights: pad the tiny (<=10-wide) dims to lane width, cast to bf16 ----
    # Weights are ~50 KiB total, so this one-time pad/cast is negligible.
    w1_p = jnp.pad(w1, ((0, 0), (0, HID_PAD - HIDDEN_SIZE))).astype(jnp.bfloat16)
    b1_p = jnp.pad(b1.reshape(1, -1), ((0, 0), (0, HID_PAD - HIDDEN_SIZE))).astype(jnp.float32)
    w2_p = jnp.pad(w2, ((0, HID_PAD - HIDDEN_SIZE), (0, OUT_PAD - NUM_CLASSES))).astype(jnp.bfloat16)
    b2_p = jnp.pad(b2.reshape(1, -1), ((0, 0), (0, OUT_PAD - NUM_CLASSES))).astype(jnp.float32)

    flops = 2 * batch * INPUT_SIZE * HIDDEN_SIZE + 2 * batch * HIDDEN_SIZE * NUM_CLASSES
    bytes_accessed = (x.size * jnp.dtype(x.dtype).itemsize
                      + w1_p.size * 2 + w2_p.size * 2 + b1_p.size * 4 + b2_p.size * 4
                      + batch * OUT_PAD * jnp.dtype(out_dtype).itemsize)

    out_pad = pl.pallas_call(
        mlp_kernel,
        out_shape=jax.ShapeDtypeStruct((batch, OUT_PAD), out_dtype),
        grid=(grid_b,),
        in_specs=[
            # x tiled over batch; last block dim = full 196 feature dim (Mosaic pads in VMEM).
            pl.BlockSpec((tb, INPUT_SIZE), lambda i: (i, 0)),
            # Weights / biases stay resident across all grid steps.
            pl.BlockSpec((INPUT_SIZE, HID_PAD), lambda i: (0, 0)),
            pl.BlockSpec((1, HID_PAD), lambda i: (0, 0)),
            pl.BlockSpec((HID_PAD, OUT_PAD), lambda i: (0, 0)),
            pl.BlockSpec((1, OUT_PAD), lambda i: (0, 0)),
        ],
        out_specs=pl.BlockSpec((tb, OUT_PAD), lambda i: (i, 0)),
        compiler_params=pltpu.CompilerParams(
            dimension_semantics=("parallel",),      # batch blocks independent -> 2 TCs on v7x
            vmem_limit_bytes=32 * 1024 * 1024,      # headroom over v5e's 16 MiB scoped default
        ),
        cost_estimate=pl.CostEstimate(
            flops=flops, transcendentals=0, bytes_accessed=bytes_accessed),
    )(x, w1_p, b1_p, w2_p, b2_p)

    # Padded columns 10..127 are exact zeros; drop them.
    # TODO(synk): a fused downstream consumer could read the lane-dense [batch, 128]
    # slab directly and skip this extra slice pass.
    return out_pad[:, :NUM_CLASSES]


def init_params(key):
    # Mimic nn.Linear's uniform(-1/sqrt(fan_in), 1/sqrt(fan_in)) init.
    k1, k2, k3, k4 = jax.random.split(key, 4)
    bound1 = 1.0 / (INPUT_SIZE ** 0.5)
    bound2 = 1.0 / (HIDDEN_SIZE ** 0.5)
    w1 = jax.random.uniform(k1, (INPUT_SIZE, HIDDEN_SIZE), jnp.float32, -bound1, bound1)
    b1 = jax.random.uniform(k2, (HIDDEN_SIZE,), jnp.float32, -bound1, bound1)
    w2 = jax.random.uniform(k3, (HIDDEN_SIZE, NUM_CLASSES), jnp.float32, -bound2, bound2)
    b2 = jax.random.uniform(k4, (NUM_CLASSES,), jnp.float32, -bound2, bound2)
    return w1, b1, w2, b2


if __name__ == "__main__":
    key = jax.random.PRNGKey(0)
    kx, kx2, kp = jax.random.split(key, 3)
    w1, b1, w2, b2 = init_params(kp)

    def ref_bf16(x):
        # Reference with the same bf16 quantization + f32 accumulation as the kernel.
        xb = x.astype(jnp.bfloat16)
        h = jnp.dot(xb, w1.astype(jnp.bfloat16), preferred_element_type=jnp.float32) + b1
        h = jnp.maximum(h, 0.0)
        return jnp.dot(h.astype(jnp.bfloat16), w2.astype(jnp.bfloat16),
                       preferred_element_type=jnp.float32) + b2

    # --- small batch (single-block path) ---------------------------------
    batch = 8
    x = jax.random.normal(kx, (batch, INPUT_SIZE), jnp.float32)
    out = jax.block_until_ready(neural_net_forward(x, w1, b1, w2, b2))
    assert out.shape == (batch, NUM_CLASSES)
    assert jnp.allclose(out, ref_bf16(x), atol=1e-3, rtol=1e-3)
    # Loose sanity check against the pure-f32 PyTorch-equivalent forward.
    ref_f32 = jnp.maximum(x @ w1 + b1, 0.0) @ w2 + b2
    assert jnp.allclose(out, ref_f32, atol=5e-2, rtol=5e-2)

    # --- larger batch: exercises grid_b >= 2 with a partial boundary block ---
    batch2 = 1037
    x2 = jax.random.normal(kx2, (batch2, INPUT_SIZE), jnp.float32)
    out2 = jax.block_until_ready(neural_net_forward(x2, w1, b1, w2, b2))
    assert out2.shape == (batch2, NUM_CLASSES)
    assert jnp.allclose(out2, ref_bf16(x2), atol=1e-3, rtol=1e-3)

    print("KERNEL_OK")
</pallas_src>

<mosaic_0001>
module attributes {stable_mosaic.version = 11 : i64} {
  func.func @mlp_kernel(%arg0: i32, %arg1: memref<8x196xf32, #tpu.memory_space<vmem>>, %arg2: memref<196x128xbf16, #tpu.memory_space<vmem>>, %arg3: memref<1x128xf32, #tpu.memory_space<vmem>>, %arg4: memref<128x128xbf16, #tpu.memory_space<vmem>>, %arg5: memref<1x128xf32, #tpu.memory_space<vmem>>, %arg6: memref<8x128xf32, #tpu.memory_space<vmem>>) attributes {dimension_semantics = [#tpu.dimension_semantics<parallel>], iteration_bounds = array<i64: 1>, scalar_prefetch = 0 : i64, scratch_operands = 0 : i64, tpu.core_type = #tpu.core_type<tc>, window_params = [{transform_indices = @transform_0, window_bounds = array<i64: 8, 196>}, {pipeline_mode = #tpu.pipeline_mode<synchronous>, transform_indices = @transform_1, window_bounds = array<i64: 196, 128>}, {pipeline_mode = #tpu.pipeline_mode<synchronous>, transform_indices = @transform_2, window_bounds = array<i64: 1, 128>}, {pipeline_mode = #tpu.pipeline_mode<synchronous>, transform_indices = @transform_3, window_bounds = array<i64: 128, 128>}, {pipeline_mode = #tpu.pipeline_mode<synchronous>, transform_indices = @transform_4, window_bounds = array<i64: 1, 128>}, {transform_indices = @transform_5, window_bounds = array<i64: 8, 128>}]} {
    %c0 = arith.constant 0 : index
    %c0_0 = arith.constant 0 : index
    %0 = vector.load %arg1[%c0, %c0_0] : memref<8x196xf32, #tpu.memory_space<vmem>>, vector<8x196xf32>
    %1 = arith.truncf %0 : vector<8x196xf32> to vector<8x196xbf16>
    %c0_1 = arith.constant 0 : index
    %c0_2 = arith.constant 0 : index
    %2 = vector.load %arg2[%c0_1, %c0_2] : memref<196x128xbf16, #tpu.memory_space<vmem>>, vector<196x128xbf16>
    %cst = arith.constant dense<0.000000e+00> : vector<8x128xf32>
    %3 = tpu.matmul %1, %2, %cst {dimension_numbers = #tpu.dot_dimension_numbers<[1], [0], [0], [1], [0, 0, 1, 1], [], []>} : vector<8x196xbf16>, vector<196x128xbf16>, vector<8x128xf32> -> vector<8x128xf32>
    %c0_3 = arith.constant 0 : index
    %c0_4 = arith.constant 0 : index
    %4 = vector.load %arg3[%c0_3, %c0_4] : memref<1x128xf32, #tpu.memory_space<vmem>>, vector<1x128xf32>
    %5 = vector.broadcast %4 : vector<1x128xf32> to vector<8x128xf32>
    %6 = arith.addf %3, %5 : vector<8x128xf32>
    %cst_5 = arith.constant 0.000000e+00 : f32
    %7 = vector.broadcast %cst_5 : f32 to vector<8x128xf32>
    %8 = arith.maximumf %6, %7 : vector<8x128xf32>
    %9 = arith.truncf %8 : vector<8x128xf32> to vector<8x128xbf16>
    %c0_6 = arith.constant 0 : index
    %c0_7 = arith.constant 0 : index
    %10 = vector.load %arg4[%c0_6, %c0_7] : memref<128x128xbf16, #tpu.memory_space<vmem>>, vector<128x128xbf16>
    %cst_8 = arith.constant dense<0.000000e+00> : vector<8x128xf32>
    %11 = tpu.matmul %9, %10, %cst_8 {dimension_numbers = #tpu.dot_dimension_numbers<[1], [0], [0], [1], [0, 0, 1, 1], [], []>} : vector<8x128xbf16>, vector<128x128xbf16>, vector<8x128xf32> -> vector<8x128xf32>
    %c0_9 = arith.constant 0 : index
    %c0_10 = arith.constant 0 : index
    %12 = vector.load %arg5[%c0_9, %c0_10] : memref<1x128xf32, #tpu.memory_space<vmem>>, vector<1x128xf32>
    %13 = vector.broadcast %12 : vector<1x128xf32> to vector<8x128xf32>
    %14 = arith.addf %11, %13 : vector<8x128xf32>
    %c0_11 = arith.constant 0 : index
    %c0_12 = arith.constant 0 : index
    %15 = vector.load %arg6[%c0_11, %c0_12] : memref<8x128xf32, #tpu.memory_space<vmem>>, vector<8x128xf32>
    tpu.vector_store %arg6[%c0_11, %c0_12], %14 {strides = array<i32>} : memref<8x128xf32, #tpu.memory_space<vmem>>, vector<8x128xf32>,
    return
  }
  func.func @transform_0(%arg0: i32) -> (i32, i32) {
    %c0_i32 = arith.constant 0 : i32
    %c0_i32_0 = arith.constant 0 : i32
    return %arg0, %c0_i32 : i32, i32
  }
  func.func @transform_1(%arg0: i32) -> (i32, i32) {
    %c0_i32 = arith.constant 0 : i32
    %c0_i32_0 = arith.constant 0 : i32
    %c0_i32_1 = arith.constant 0 : i32
    return %c0_i32, %c0_i32_0 : i32, i32
  }
  func.func @transform_2(%arg0: i32) -> (i32, i32) {
    %c0_i32 = arith.constant 0 : i32
    %c0_i32_0 = arith.constant 0 : i32
    %c0_i32_1 = arith.constant 0 : i32
    return %c0_i32, %c0_i32_0 : i32, i32
  }
  func.func @transform_3(%arg0: i32) -> (i32, i32) {
    %c0_i32 = arith.constant 0 : i32
    %c0_i32_0 = arith.constant 0 : i32
    %c0_i32_1 = arith.constant 0 : i32
    return %c0_i32, %c0_i32_0 : i32, i32
  }
  func.func @transform_4(%arg0: i32) -> (i32, i32) {
    %c0_i32 = arith.constant 0 : i32
    %c0_i32_0 = arith.constant 0 : i32
    %c0_i32_1 = arith.constant 0 : i32
    return %c0_i32, %c0_i32_0 : i32, i32
  }
  func.func @transform_5(%arg0: i32) -> (i32, i32) {
    %c0_i32 = arith.constant 0 : i32
    %c0_i32_0 = arith.constant 0 : i32
    return %arg0, %c0_i32 : i32, i32
  }
}

</mosaic_0001>

<llo_original>
// kernel: tpu_custom_call.1
$region0: #{tpu_custom_call.1}
  #allocation0 [shape = 'u32[]', space=smem, size = 0x4, offset = 0x4, fixed_abs, tag = 'smem constant byte address 0x4 - core index']
  #allocation1 [shape = 'u32[72,128]{1,0:T(1,128)}', space=vmem, size = 0x9000, scoped, tag = 'internal scratch']
  %s0 = inlined_call_operand.hbm [shape: f32[8,196], index: 0, kind: input, shape index: {}]
  %s1 = inlined_call_operand.hbm [shape: bf16[196,128], index: 1, kind: input, shape index: {}]
  %s2 = inlined_call_operand.vmem [shape: f32[1,128], index: 2, kind: input, shape index: {}]
  %s3 = inlined_call_operand.hbm [shape: bf16[128,128], index: 3, kind: input, shape index: {}]
  %s4 = inlined_call_operand.vmem [shape: f32[1,128], index: 4, kind: input, shape index: {}]
  %s5 = inlined_call_operand.hbm [shape: f32[8,128], index: 5, kind: output, shape index: {}]
  %s6 = sld [smem:[#allocation0]]
  $region42: #{tpu_custom_call.1} parent=0
    _
  %s8 = ssub.s32 1, %s6
  %s9 = scalar_select 0, %s8, %s6
  $region1: #{tpu_custom_call.1} parent=0
    #allocation2 [shape = 'u8[8192]{0}', space=vmem, size = 0x2000, scoped, tag = 'input window, operand 0, single buffered']
    #allocation3 [shape = 's32[1]{0}', space=sflag, size = 0x4, scoped, tag = 'scoped memory for tpu_custom_call.1']
    #allocation4 [shape = 's32[1]{0}', space=sflag, size = 0x4, scoped, tag = 'scoped memory for tpu_custom_call.1']
    #allocation5 [shape = 'u8[51200]{0}', space=vmem, size = 0xc800, scoped, tag = 'input window, operand 1, single buffered']
    #allocation6 [shape = 's32[1]{0}', space=sflag, size = 0x4, scoped, tag = 'scoped memory for tpu_custom_call.1']
    #allocation7 [shape = 'u8[32768]{0}', space=vmem, size = 0x8000, scoped, tag = 'input window, operand 3, single buffered']
    #allocation8 [shape = 'u8[4096]{0}', space=vmem, size = 0x1000, scoped, tag = 'output window, operand 0, single buffered']
    %10 = vsyncpa [#allocation3], 0
    %11 = vsyncpa [#allocation6], 0
    %12 = vsyncpa [#allocation4], 0
    // Predicated region
    $region2: #{tpu_custom_call.1} parent=1 // pred_check
      _
    $region3: #{tpu_custom_call.1} parent=1 // pred_check_branch
      %14 = sbr.rel (0) target = $region5
    $region4: #{tpu_custom_call.1} parent=1 // pred_region
      %16 = vsyncadd [#allocation3], 0
      %s18 = sshll.u32 %s0, 4
      %s19 = int_to_ptr.hbm [resolvable:$true] %s18
      %s20 = sshll.u32 [#allocation2], 4
      %s21 = int_to_ptr.vmem [resolvable:$true] %s20
      %23 = dma.hbm_to_vmem [thread:$0]  %s19, 256, %s21, [#allocation3]
    $region5: #{tpu_custom_call.1} parent=1 // pred_fallthru
      _
    // Predicated region
    $region6: #{tpu_custom_call.1} parent=1 // pred_check
      _
    $region7: #{tpu_custom_call.1} parent=1 // pred_check_branch
      %25 = sbr.rel (0) target = $region9
    $region8: #{tpu_custom_call.1} parent=1 // pred_region
      %27 = vsyncadd [#allocation6], 0
      %s28 = sshll.u32 %s1, 4
      %s29 = int_to_ptr.hbm [resolvable:$true] %s28
      %s30 = sshll.u32 [#allocation5], 4
      %s31 = int_to_ptr.vmem [resolvable:$true] %s30
      %36 = dma.hbm_to_vmem [thread:$0]  %s29, 1600, %s31, [#allocation6], 64, 64, 4
    $region9: #{tpu_custom_call.1} parent=1 // pred_fallthru
      _
    // Predicated region
    $region10: #{tpu_custom_call.1} parent=1 // pred_check
      _
    $region11: #{tpu_custom_call.1} parent=1 // pred_check_branch
      %38 = sbr.rel (0) target = $region13
    $region12: #{tpu_custom_call.1} parent=1 // pred_region
      _
    $region13: #{tpu_custom_call.1} parent=1 // pred_fallthru
      _
    // Predicated region
    $region14: #{tpu_custom_call.1} parent=1 // pred_check
      _
    $region15: #{tpu_custom_call.1} parent=1 // pred_check_branch
      %40 = sbr.rel (0) target = $region17
    $region16: #{tpu_custom_call.1} parent=1 // pred_region
      %42 = vsyncadd [#allocation6], 0
      %s43 = sshll.u32 %s3, 4
      %s44 = int_to_ptr.hbm [resolvable:$true] %s43
      %s45 = sshll.u32 [#allocation7], 4
      %s46 = int_to_ptr.vmem [resolvable:$true] %s45
      %51 = dma.hbm_to_vmem [thread:$0]  %s44, 1024, %s46, [#allocation6], 64, 64, 4
    $region17: #{tpu_custom_call.1} parent=1 // pred_fallthru
      _
    // Predicated region
    $region18: #{tpu_custom_call.1} parent=1 // pred_check
      _
    $region19: #{tpu_custom_call.1} parent=1 // pred_check_branch
      %53 = sbr.rel (0) target = $region21
    $region20: #{tpu_custom_call.1} parent=1 // pred_region
      _
    $region21: #{tpu_custom_call.1} parent=1 // pred_fallthru
      _
    // Predicated region
    $region22: #{tpu_custom_call.1} parent=1 // pred_check
      _
    $region23: #{tpu_custom_call.1} parent=1 // pred_check_branch
      %55 = sbr.rel (0) target = $region25
    $region24: #{tpu_custom_call.1} parent=1 // pred_region
      %57 = dma.done [#allocation3], 256
    $region25: #{tpu_custom_call.1} parent=1 // pred_fallthru
      _
    // Predicated region
    $region26: #{tpu_custom_call.1} parent=1 // pred_check
      _
    $region27: #{tpu_custom_call.1} parent=1 // pred_check_branch
      %59 = sbr.rel (0) target = $region29
    $region28: #{tpu_custom_call.1} parent=1 // pred_region
      %61 = dma.done [#allocation6], 1600
    $region29: #{tpu_custom_call.1} parent=1 // pred_fallthru
      _
    // Predicated region
    $region30: #{tpu_custom_call.1} parent=1 // pred_check
      _
    $region31: #{tpu_custom_call.1} parent=1 // pred_check_branch
      %63 = sbr.rel (0) target = $region33
    $region32: #{tpu_custom_call.1} parent=1 // pred_region
      %65 = dma.done [#allocation6], 1024
    $region33: #{tpu_custom_call.1} parent=1 // pred_fallthru
      _
    %v67 = vld [vmem:[#allocation2] sm:$0xff]
    %v68 = vld [vmem:[#allocation2 + $0x8] sm:$0xff]
    %v69 = vpack.c.bf16 %v67, %v67
    %v70 = vpack.c.bf16 %v68, %v68
    %v71 = vld [vmem:[#allocation5] sm:$0xf]
    %v72 = vld [vmem:[#allocation5 + $0x4] sm:$0xf]
    %v73 = vld [vmem:[#allocation5 + $0x8] sm:$0xf]
    %v74 = vld [vmem:[#allocation5 + $0xc] sm:$0xf]
    %v75 = vld [vmem:[#allocation5 + $0x10] sm:$0xf]
    %v76 = vld [vmem:[#allocation5 + $0x14] sm:$0xf]
    %v77 = vld [vmem:[#allocation5 + $0x18] sm:$0xf]
    %v78 = vld [vmem:[#allocation5 + $0x1c] sm:$0xf]
    %v79 = vld [vmem:[#allocation5 + $0x20] sm:$0xf]
    %v80 = vld [vmem:[#allocation5 + $0x24] sm:$0xf]
    %v81 = vld [vmem:[#allocation5 + $0x28] sm:$0xf]
    %v82 = vld [vmem:[#allocation5 + $0x2c] sm:$0xf]
    %v83 = vld [vmem:[#allocation5 + $0x30] sm:$0xf]
    %v84 = vld [vmem:[#allocation5 + $0x34] sm:$0xf]
    %v85 = vld [vmem:[#allocation5 + $0x38] sm:$0xf]
    %v86 = vld [vmem:[#allocation5 + $0x3c] sm:$0xf]
    %v87 = vld [vmem:[#allocation5 + $0x40] sm:$0xf]
    %v88 = vld [vmem:[#allocation5 + $0x44] sm:$0xf]
    %v89 = vld [vmem:[#allocation5 + $0x48] sm:$0xf]
    %v90 = vld [vmem:[#allocation5 + $0x4c] sm:$0xf]
    %v91 = vld [vmem:[#allocation5 + $0x50] sm:$0xf]
    %v92 = vld [vmem:[#allocation5 + $0x54] sm:$0xf]
    %v93 = vld [vmem:[#allocation5 + $0x58] sm:$0xf]
    %v94 = vld [vmem:[#allocation5 + $0x5c] sm:$0xf]
    %v95 = vld [vmem:[#allocation5 + $0x60] sm:$0x3]
    %v96 = vld [vmem:[%s2] sm:$0x1]
    %v98 = vperm.slane %v96, 0
    %v125 = vunpack.c.l.b16 %v71
    %v126 = vunpack.c.l.b16 %v72
    %v127 = vunpack.c.l.b16 %v73
    %v128 = vunpack.c.l.b16 %v74
    %v129 = vunpack.c.l.b16 %v75
    %v130 = vunpack.c.l.b16 %v76
    %v131 = vunpack.c.l.b16 %v77
    %v132 = vunpack.c.l.b16 %v78
    %v133 = vunpack.c.l.b16 %v79
    %v134 = vunpack.c.l.b16 %v80
    %v135 = vunpack.c.l.b16 %v81
    %v136 = vunpack.c.l.b16 %v82
    %v137 = vunpack.c.l.b16 %v83
    %v138 = vunpack.c.l.b16 %v84
    %v139 = vunpack.c.l.b16 %v85
    %v140 = vunpack.c.l.b16 %v86
    %v141 = vunpack.c.l.b16 %v87
    %v142 = vunpack.c.l.b16 %v88
    %v143 = vunpack.c.l.b16 %v89
    %v144 = vunpack.c.l.b16 %v90
    %v145 = vunpack.c.l.b16 %v91
    %v146 = vunpack.c.l.b16 %v92
    %v147 = vunpack.c.l.b16 %v93
    %v148 = vunpack.c.l.b16 %v94
    %v149 = vunpack.c.l.b16 %v95
    %v150 = vpack.c.b16 %v126, %v125
    %v151 = vpack.c.b16 %v128, %v127
    %v152 = vpack.c.b16 %v130, %v129
    %v153 = vpack.c.b16 %v132, %v131
    %v154 = vpack.c.b16 %v134, %v133
    %v155 = vpack.c.b16 %v136, %v135
    %v156 = vpack.c.b16 %v138, %v137
    %v157 = vpack.c.b16 %v140, %v139
    %v158 = vpack.c.b16 %v142, %v141
    %v159 = vpack.c.b16 %v144, %v143
    %v160 = vpack.c.b16 %v146, %v145
    %v161 = vpack.c.b16 %v148, %v147
    %v162 = vpack.c.b16 %v149, %v149
    %vm175 = vcmask 556032
    %v177 = vsel %vm175, %v70, 0
    %vm179 = vcmask 1041408
    %v181 = vsel %vm179, %v162, 0
    %183 = vmatpush.bf16.msra.mxu0 %v157
    %184 = vmatpush.bf16.msra.mxu0 %v156
    %185 = vmatpush.bf16.msra.mxu0 %v155
    %186 = vmatpush.bf16.msra.mxu0 %v154
    %187 = vmatpush.bf16.msra.mxu0 %v153
    %188 = vmatpush.bf16.msra.mxu0 %v152
    %189 = vmatpush.bf16.msra.mxu0 %v151
    %190 = vmatpush.bf16.msra.mxu0 %v150
    %191 = vmatmul.bf16.gmra.mxu0 %v69
    %v192 = vpop.f32.mrf.mxu0
    %v193 = vadd.f32 %v98, %v192
    %v194 = vpop.f32.mrf.mxu0
    %195 = vdwg.mxu0
    %196 = vmatpush.bf16.msra.mxu0 0
    %197 = vmatpush.bf16.msra.mxu0 0
    %198 = vmatpush.bf16.msra.mxu0 0
    %199 = vmatpush.bf16.msra.mxu0 %v181
    %200 = vmatpush.bf16.msra.mxu0 %v161
    %201 = vmatpush.bf16.msra.mxu0 %v160
    %202 = vmatpush.bf16.msra.mxu0 %v159
    %203 = vmatpush.bf16.msra.mxu0 %v158
    %204 = vmatmul.bf16.gmra.mxu0 %v177
    %v205 = vpop.f32.mrf.mxu0
    %v206 = vadd.f32 %v193, %v205
    %v207 = vpop.f32.mrf.mxu0
    %208 = vdwg.mxu0
    %v209 = vmax.f32 %v206, 0.0
    %v210 = vpack.c.bf16 %v209, %v209
    %v211 = vld [vmem:[#allocation7] sm:$0xf]
    %v212 = vld [vmem:[#allocation7 + $0x4] sm:$0xf]
    %v213 = vld [vmem:[#allocation7 + $0x8] sm:$0xf]
    %v214 = vld [vmem:[#allocation7 + $0xc] sm:$0xf]
    %v215 = vld [vmem:[#allocation7 + $0x10] sm:$0xf]
    %v216 = vld [vmem:[#allocation7 + $0x14] sm:$0xf]
    %v217 = vld [vmem:[#allocation7 + $0x18] sm:$0xf]
    %v218 = vld [vmem:[#allocation7 + $0x1c] sm:$0xf]
    %v219 = vld [vmem:[#allocation7 + $0x20] sm:$0xf]
    %v220 = vld [vmem:[#allocation7 + $0x24] sm:$0xf]
    %v221 = vld [vmem:[#allocation7 + $0x28] sm:$0xf]
    %v222 = vld [vmem:[#allocation7 + $0x2c] sm:$0xf]
    %v223 = vld [vmem:[#allocation7 + $0x30] sm:$0xf]
    %v224 = vld [vmem:[#allocation7 + $0x34] sm:$0xf]
    %v225 = vld [vmem:[#allocation7 + $0x38] sm:$0xf]
    %v226 = vld [vmem:[#allocation7 + $0x3c] sm:$0xf]
    %v227 = vld [vmem:[%s4] sm:$0x1]
    %v229 = vperm.slane %v227, 0
    %v247 = vunpack.c.l.b16 %v211
    %v248 = vunpack.c.l.b16 %v212
    %v249 = vunpack.c.l.b16 %v213
    %v250 = vunpack.c.l.b16 %v214
    %v251 = vunpack.c.l.b16 %v215
    %v252 = vunpack.c.l.b16 %v216
    %v253 = vunpack.c.l.b16 %v217
    %v254 = vunpack.c.l.b16 %v218
    %v255 = vunpack.c.l.b16 %v219
    %v256 = vunpack.c.l.b16 %v220
    %v257 = vunpack.c.l.b16 %v221
    %v258 = vunpack.c.l.b16 %v222
    %v259 = vunpack.c.l.b16 %v223
    %v260 = vunpack.c.l.b16 %v224
    %v261 = vunpack.c.l.b16 %v225
    %v262 = vunpack.c.l.b16 %v226
    %v263 = vpack.c.b16 %v248, %v247
    %v264 = vpack.c.b16 %v250, %v249
    %v265 = vpack.c.b16 %v252, %v251
    %v266 = vpack.c.b16 %v254, %v253
    %v267 = vpack.c.b16 %v256, %v255
    %v268 = vpack.c.b16 %v258, %v257
    %v269 = vpack.c.b16 %v260, %v259
    %v270 = vpack.c.b16 %v262, %v261
    %279 = vmatpush.bf16.msra.mxu0 %v270
    %280 = vmatpush.bf16.msra.mxu0 %v269
    %281 = vmatpush.bf16.msra.mxu0 %v268
    %282 = vmatpush.bf16.msra.mxu0 %v267
    %283 = vmatpush.bf16.msra.mxu0 %v266
    %284 = vmatpush.bf16.msra.mxu0 %v265
    %285 = vmatpush.bf16.msra.mxu0 %v264
    %286 = vmatpush.bf16.msra.mxu0 %v263
    %287 = vmatmul.bf16.gmra.mxu0 %v210
    %v288 = vpop.f32.mrf.mxu0
    %v289 = vadd.f32 %v229, %v288
    %v290 = vpop.f32.mrf.mxu0
    %291 = vdwg.mxu0
    %292 = vst [vmem:[#allocation8] sm:$0xff] %v289
    // Predicated region
    $region34: #{tpu_custom_call.1} parent=1 // pred_check
      _
    $region35: #{tpu_custom_call.1} parent=1 // pred_check_branch
      %294 = sbr.rel (0) target = $region37
    $region36: #{tpu_custom_call.1} parent=1 // pred_region
      %296 = vsyncadd [#allocation4], 0
      %s298 = sshll.u32 [#allocation8], 4
      %s299 = int_to_ptr.vmem [resolvable:$true] %s298
      %s300 = sshll.u32 %s5, 4
      %s301 = int_to_ptr.hbm [resolvable:$true] %s300
      %303 = dma.vmem_to_hbm [thread:$0]  %s299, 128, %s301, [#allocation4]
    $region37: #{tpu_custom_call.1} parent=1 // pred_fallthru
      _
    // Predicated region
    $region38: #{tpu_custom_call.1} parent=1 // pred_check
      _
    $region39: #{tpu_custom_call.1} parent=1 // pred_check_branch
      %305 = sbr.rel (0) target = $region41
    $region40: #{tpu_custom_call.1} parent=1 // pred_region
      %307 = dma.done [#allocation4], 128
    $region41: #{tpu_custom_call.1} parent=1 // pred_fallthru
      _
    %308 = vsyncpa [#allocation3], 1
    %309 = vsyncpa [#allocation6], 1
    %310 = vsyncpa [#allocation4], 1

</llo_original>
